<compile_context>
chip_gen: v7x
topology: tpu7x:2x2x1
jax: 0.10.0
libtpu: 0.0.40
codegen_flags: <defaults>
</compile_context>

<pallas_src>
import jax
import jax.numpy as jnp
from jax.experimental import pallas as pl
from jax.experimental.pallas import tpu as pltpu


def _focus_cbs_kernel(x_ref, w_ref, b_ref, o_ref):
    # One MXU GEMM: (C2, 4*C1) @ (4*C1, TM) -> (C2, TM), accumulated in f32.
    y = jnp.dot(w_ref[...], x_ref[...], preferred_element_type=jnp.float32)
    y = y + b_ref[...]                                   # (C2, 1) bias, broadcast along lanes
    # SiLU: y * sigmoid(y) with sigmoid via tanh -> single EUP pass, bounded on
    # any OOB tail-tile columns.
    o_ref[...] = (0.5 * y * (1.0 + jnp.tanh(0.5 * y))).astype(o_ref.dtype)


def _pick_tile_and_vmem(S):
    """Generation-aware spatial (lane) tile size and scoped-VMEM limit."""
    try:
        vmem_cap = pltpu.get_tpu_info().vmem_capacity_bytes
    except Exception:
        vmem_cap = 128 * 1024 * 1024          # fall back to v5e/v6e sizing
    if vmem_cap <= 64 * 1024 * 1024:
        # v7x: HBM ~2.3x faster so per-step overhead binds sooner -> bigger tile,
        # but only 64 MiB physical VMEM -> cap the scoped limit at 48 MiB.
        tm_cap, vmem_limit = 16384, 48 * 1024 * 1024
    else:
        # v5e / v6e
        tm_cap, vmem_limit = 8192, 32 * 1024 * 1024
    return (S if S <= tm_cap else tm_cap), vmem_limit


def focus_forward(x, conv_w, bn_gamma, bn_beta, bn_mean, bn_var, eps=1e-5):
    """x: (N, C1, H, W) NCHW f32. conv_w: (C2, 4*C1, 1, 1). Returns (N, C2, H/2, W/2)."""
    N, C1, H, W = x.shape
    H2, W2 = H // 2, W // 2
    S = H2 * W2
    C2 = conv_w.shape[0]
    K = 4 * C1

    # Space-to-depth in ONE fused wrapper copy, quadrant-major so that
    #   packed[n, q*C1 + c, h*W2 + w] == x[n, c, 2*h + q//2, 2*w + q%2],
    # i.e. exactly torch.cat((ee), (even,odd), (odd,even), (oo)) channel order.
    xp = (x.reshape(N, C1, H2, 2, W2, 2)
            .transpose(0, 3, 5, 1, 2, 4)
            .reshape(N, K, S))

    # Fold BatchNorm (eval) into the conv weight / a per-channel bias.
    scale = bn_gamma / jnp.sqrt(bn_var + eps)                          # (C2,)
    w = (conv_w.reshape(C2, K) * scale[:, None]).astype(jnp.float32)   # (C2, 4*C1)
    bias = (bn_beta - bn_mean * scale).reshape(C2, 1).astype(jnp.float32)

    TM, vmem_limit = _pick_tile_and_vmem(S)
    grid = (N, pl.cdiv(S, TM))

    out = pl.pallas_call(
        _focus_cbs_kernel,
        out_shape=jax.ShapeDtypeStruct((N, C2, S), x.dtype),
        grid_spec=pltpu.PrefetchScalarGridSpec(
            num_scalar_prefetch=0,
            grid=grid,
            in_specs=[
                pl.BlockSpec((None, K, TM), lambda n, i: (n, 0, i)),   # packed quadrants
                pl.BlockSpec((C2, K), lambda n, i: (0, 0)),            # BN-folded weight (resident)
                pl.BlockSpec((C2, 1), lambda n, i: (0, 0)),            # bias (resident)
            ],
            out_specs=pl.BlockSpec((None, C2, TM), lambda n, i: (n, 0, i)),
        ),
        compiler_params=pltpu.CompilerParams(
            dimension_semantics=("parallel", "parallel"),
            vmem_limit_bytes=vmem_limit,
        ),
    )(xp, w, bias)

    # (N, C2, S) -> (N, C2, H2, W2): pure metadata reshape, already NCHW.
    return out.reshape(N, C2, H2, W2)


def _reference(x, conv_w, bn_gamma, bn_beta, bn_mean, bn_var, eps=1e-5):
    """Pure-JAX reference mirroring the PyTorch forward (Conv2d 1x1 + BN eval + SiLU)."""
    xa = x[..., ::2, ::2]
    xb = x[..., ::2, 1::2]
    xc = x[..., 1::2, ::2]
    xd = x[..., 1::2, 1::2]
    xf = jnp.concatenate([xa, xb, xc, xd], axis=1)
    y = jnp.einsum("nkhw,ck->nchw", xf, conv_w.reshape(conv_w.shape[0], -1))
    y = (y - bn_mean[None, :, None, None]) / jnp.sqrt(bn_var[None, :, None, None] + eps)
    y = y * bn_gamma[None, :, None, None] + bn_beta[None, :, None, None]
    return y * jax.nn.sigmoid(y)


if __name__ == "__main__":
    # Small shapes consistent with Focus: N=2, C1=4, H=W=16, C2=8, k=1, s=1.
    N, C1, H, W, C2 = 2, 4, 16, 16, 8
    key = jax.random.PRNGKey(0)
    kx, kw, kg, kb, km, kv = jax.random.split(key, 6)

    x = jax.random.normal(kx, (N, C1, H, W), dtype=jnp.float32)
    conv_w = 0.1 * jax.random.normal(kw, (C2, 4 * C1, 1, 1), dtype=jnp.float32)
    bn_gamma = 1.0 + 0.1 * jax.random.normal(kg, (C2,), dtype=jnp.float32)
    bn_beta = 0.1 * jax.random.normal(kb, (C2,), dtype=jnp.float32)
    bn_mean = 0.1 * jax.random.normal(km, (C2,), dtype=jnp.float32)
    bn_var = jnp.abs(jax.random.normal(kv, (C2,), dtype=jnp.float32)) + 0.5

    out = focus_forward(x, conv_w, bn_gamma, bn_beta, bn_mean, bn_var)
    out = jax.block_until_ready(out)

    ref = _reference(x, conv_w, bn_gamma, bn_beta, bn_mean, bn_var)
    assert out.shape == (N, C2, H // 2, W // 2), out.shape
    assert jnp.allclose(out, ref, atol=1e-5, rtol=1e-5), float(jnp.max(jnp.abs(out - ref)))

    print("KERNEL_OK")
</pallas_src>

<mosaic_0001>
module attributes {stable_mosaic.version = 11 : i64} {
  func.func @_focus_cbs_kernel(%arg0: i32, %arg1: i32, %arg2: memref<1x16x64xf32, #tpu.memory_space<vmem>>, %arg3: memref<8x16xf32, #tpu.memory_space<vmem>>, %arg4: memref<8x1xf32, #tpu.memory_space<vmem>>, %arg5: memref<1x8x64xf32, #tpu.memory_space<vmem>>) attributes {dimension_semantics = [#tpu.dimension_semantics<parallel>, #tpu.dimension_semantics<parallel>], iteration_bounds = array<i64: 2, 1>, scalar_prefetch = 0 : i64, scratch_operands = 0 : i64, tpu.core_type = #tpu.core_type<tc>, window_params = [{transform_indices = @transform_0, window_bounds = array<i64: 1, 16, 64>}, {pipeline_mode = #tpu.pipeline_mode<synchronous>, transform_indices = @transform_1, window_bounds = array<i64: 8, 16>}, {pipeline_mode = #tpu.pipeline_mode<synchronous>, transform_indices = @transform_2, window_bounds = array<i64: 8, 1>}, {transform_indices = @transform_3, window_bounds = array<i64: 1, 8, 64>}]} {
    %c0 = arith.constant 0 : index
    %c0_0 = arith.constant 0 : index
    %0 = vector.load %arg3[%c0, %c0_0] : memref<8x16xf32, #tpu.memory_space<vmem>>, vector<8x16xf32>
    %c0_1 = arith.constant 0 : index
    %c0_2 = arith.constant 0 : index
    %c0_3 = arith.constant 0 : index
    %1 = vector.load %arg2[%c0_1, %c0_2, %c0_3] : memref<1x16x64xf32, #tpu.memory_space<vmem>>, vector<1x16x64xf32>
    %2 = vector.shape_cast %1 : vector<1x16x64xf32> to vector<16x64xf32>
    %cst = arith.constant dense<0.000000e+00> : vector<8x64xf32>
    %3 = tpu.matmul %0, %2, %cst {dimension_numbers = #tpu.dot_dimension_numbers<[1], [0], [0], [1], [0, 0, 1, 1], [], []>} : vector<8x16xf32>, vector<16x64xf32>, vector<8x64xf32> -> vector<8x64xf32>
    %c0_4 = arith.constant 0 : index
    %c0_5 = arith.constant 0 : index
    %4 = vector.load %arg4[%c0_4, %c0_5] : memref<8x1xf32, #tpu.memory_space<vmem>>, vector<8x1xf32>
    %5 = vector.broadcast %4 : vector<8x1xf32> to vector<8x64xf32>
    %6 = arith.addf %3, %5 : vector<8x64xf32>
    %cst_6 = arith.constant 5.000000e-01 : f32
    %7 = vector.broadcast %cst_6 : f32 to vector<8x64xf32>
    %8 = arith.mulf %7, %6 : vector<8x64xf32>
    %cst_7 = arith.constant 5.000000e-01 : f32
    %9 = vector.broadcast %cst_7 : f32 to vector<8x64xf32>
    %10 = arith.mulf %9, %6 : vector<8x64xf32>
    %11 = math.tanh %10 : vector<8x64xf32>
    %cst_8 = arith.constant 1.000000e+00 : f32
    %12 = vector.broadcast %cst_8 : f32 to vector<8x64xf32>
    %13 = arith.addf %12, %11 : vector<8x64xf32>
    %14 = arith.mulf %8, %13 : vector<8x64xf32>
    %c0_9 = arith.constant 0 : index
    %c0_10 = arith.constant 0 : index
    %c0_11 = arith.constant 0 : index
    %15 = vector.load %arg5[%c0_9, %c0_10, %c0_11] : memref<1x8x64xf32, #tpu.memory_space<vmem>>, vector<1x8x64xf32>
    %16 = vector.shape_cast %15 : vector<1x8x64xf32> to vector<8x64xf32>
    %17 = vector.shape_cast %14 : vector<8x64xf32> to vector<1x8x64xf32>
    tpu.vector_store %arg5[%c0_9, %c0_10, %c0_11], %17 {strides = array<i32>} : memref<1x8x64xf32, #tpu.memory_space<vmem>>, vector<1x8x64xf32>,
    return
  }
  func.func @transform_0(%arg0: i32, %arg1: i32) -> (i32, i32, i32) {
    %c0_i32 = arith.constant 0 : i32
    %c0_i32_0 = arith.constant 0 : i32
    return %arg0, %c0_i32, %arg1 : i32, i32, i32
  }
  func.func @transform_1(%arg0: i32, %arg1: i32) -> (i32, i32) {
    %c0_i32 = arith.constant 0 : i32
    %c0_i32_0 = arith.constant 0 : i32
    %c0_i32_1 = arith.constant 0 : i32
    return %c0_i32, %c0_i32_0 : i32, i32
  }
  func.func @transform_2(%arg0: i32, %arg1: i32) -> (i32, i32) {
    %c0_i32 = arith.constant 0 : i32
    %c0_i32_0 = arith.constant 0 : i32
    %c0_i32_1 = arith.constant 0 : i32
    return %c0_i32, %c0_i32_0 : i32, i32
  }
  func.func @transform_3(%arg0: i32, %arg1: i32) -> (i32, i32, i32) {
    %c0_i32 = arith.constant 0 : i32
    %c0_i32_0 = arith.constant 0 : i32
    return %arg0, %c0_i32, %arg1 : i32, i32, i32
  }
}

</mosaic_0001>

<llo_original>
// kernel: tpu_custom_call.1
$region0: #{tpu_custom_call.1}
  #allocation0 [shape = 'u32[]', space=smem, size = 0x4, offset = 0x4, fixed_abs, tag = 'smem constant byte address 0x4 - core index']
  #allocation1 [shape = 'u32[144,128]{1,0:T(1,128)}', space=vmem, size = 0x12000, scoped, tag = 'internal scratch']
  %s0 = inlined_call_operand.hbm [shape: f32[2,16,64], index: 0, kind: input, shape index: {}]
  %s1 = inlined_call_operand.vmem [shape: f32[8,16], index: 1, kind: input, shape index: {}]
  %s2 = inlined_call_operand.vmem [shape: f32[8,1], index: 2, kind: input, shape index: {}]
  %s3 = inlined_call_operand.hbm [shape: f32[2,8,64], index: 3, kind: output, shape index: {}]
  %s4 = sld [smem:[#allocation0]]
  $region49: #{tpu_custom_call.1} parent=0
    _
  %s6 = ssub.s32 1, %s4
  %s7 = scalar_select 0, %s6, %s4
  $region1: #{tpu_custom_call.1} parent=0
    #allocation2 [shape = 'u8[16384]{0}', space=vmem, size = 0x4000, scoped, tag = 'input window, operand 0']
    #allocation3 [shape = 's32[2]{0}', space=sflag, size = 0x8, scoped, tag = 'scoped memory for tpu_custom_call.1']
    #allocation4 [shape = 's32[2]{0}', space=sflag, size = 0x8, scoped, tag = 'scoped memory for tpu_custom_call.1']
    #allocation5 [shape = 'u8[8192]{0}', space=vmem, size = 0x2000, scoped, tag = 'output window, operand 0']
    %8 = vsyncpa [#allocation3], 0
    %s9 = scalar_lea.sflag [#allocation3], 1
    %10 = vsyncpa %s9, 0
    %11 = vsyncpa [#allocation4], 0
    %s12 = scalar_lea.sflag [#allocation4], 1
    %13 = vsyncpa %s12, 0
    loop: start=0, step=1, limit=4
    $region2: #{tpu_custom_call.1} parent=1 // loop_pre_header
      _
    $region3: #{tpu_custom_call.1} parent=1 // loop_header
      %s15 = sphi 0, %s19
      %p16 = scmp.ge.s32.totalorder %s15, 4
      %s22 = sphi 0, %s34
      %s23 = sphi 0, %s30
      %s24 = sphi 0, %s22
      %s25 = sphi 0, %s23
      %s26 = sphi 0, %s24
      %s27 = sphi 0, %s25
      %s39 = sphi 0, %s41
      %s42 = sphi 0, %s39
      %s43 = sphi 0, %s42
      %s59 = sphi 0, %s43
      %s63 = sphi 0, %s63
      %s65 = sphi 0, %s63
      %s66 = sphi 0, %s65
      %s80 = sphi 0, %s66
      %s84 = sphi 0, %s84
      %s86 = sphi 0, %s84
      %s87 = sphi 0, %s86
      %s101 = sphi 0, %s87
      %s109 = sphi 0, %s111
      %s112 = sphi 0, %s109
      %s113 = sphi 0, %s112
      %s129 = sphi 0, %s113
    $region4: #{tpu_custom_call.1} parent=1 // loop_header_branch
      %18 = sbr.rel (%p16) target = $region8
    $region5: #{tpu_custom_call.1} parent=1 // loop_body
      %s20 = ssub.s32 %s15, 1
      %s21 = ssub.s32 %s15, 2
      %s28 = sadd.s32 1, %s23
      %p29 = scmp.ge.s32.totalorder %s28, 1
      %s30 = scalar_select %p29, 0, %s28
      %s31 = sadd.s32 1, %s22
      %s32 = scalar_select %p29, %s31, %s22
      %p33 = scmp.ge.s32.totalorder %s32, 2
      %s34 = scalar_select %p33, 0, %s32
      %s35 = ssub.s32 %s22, %s34
      %s36 = ssub.s32 %s23, %s30
      %s37 = sor.u32 %s35, %s36
      %p38 = scmp.eq.s32.totalorder %s37, 0
      %s40 = sadd.s32 %s39, 1
      %s41 = scalar_select %p38, %s39, %s40
      %p44 = pneg %p38
      %p45 = scmp.eq.s32.totalorder %s15, 1
      %p46 = por %p44, %p45
      %p47 = scmp.ne.s32.totalorder %s39, %s42
      %p48 = scmp.eq.s32.totalorder %s15, 0
      %p49 = por %p47, %p48
      %p50 = scmp.ne.s32.totalorder %s39, %s42
      %p51 = scmp.eq.s32.totalorder %s20, 1
      %p52 = por %p50, %p51
      %p53 = scmp.ne.s32.totalorder %s42, %s43
      %p54 = scmp.eq.s32.totalorder %s20, 0
      %p55 = por %p53, %p54
      %p56 = scmp.ne.s32.totalorder %s42, %s43
      %p57 = scmp.eq.s32.totalorder %s21, 1
      %p58 = por %p56, %p57
      %p60 = scmp.ne.s32.totalorder %s43, %s59
      %p61 = scmp.eq.s32.totalorder %s21, 0
      %p62 = por %p60, %p61
      %s64 = sadd.s32 %s63, 1
      %p67 = scmp.eq.s32.totalorder %s15, 1
      %p68 = scmp.ne.s32.totalorder %s63, %s65
      %p69 = scmp.eq.s32.totalorder %s15, 0
      %p70 = por %p68, %p69
      %p71 = scmp.ne.s32.totalorder %s63, %s65
      %p72 = scmp.eq.s32.totalorder %s20, 1
      %p73 = por %p71, %p72
      %p74 = scmp.ne.s32.totalorder %s65, %s66
      %p75 = scmp.eq.s32.totalorder %s20, 0
      %p76 = por %p74, %p75
      %p77 = scmp.ne.s32.totalorder %s65, %s66
      %p78 = scmp.eq.s32.totalorder %s21, 1
      %p79 = por %p77, %p78
      %p81 = scmp.ne.s32.totalorder %s66, %s80
      %p82 = scmp.eq.s32.totalorder %s21, 0
      %p83 = por %p81, %p82
      %s85 = sadd.s32 %s84, 1
      %p88 = scmp.eq.s32.totalorder %s15, 1
      %p89 = scmp.ne.s32.totalorder %s84, %s86
      %p90 = scmp.eq.s32.totalorder %s15, 0
      %p91 = por %p89, %p90
      %p92 = scmp.ne.s32.totalorder %s84, %s86
      %p93 = scmp.eq.s32.totalorder %s20, 1
      %p94 = por %p92, %p93
      %p95 = scmp.ne.s32.totalorder %s86, %s87
      %p96 = scmp.eq.s32.totalorder %s20, 0
      %p97 = por %p95, %p96
      %p98 = scmp.ne.s32.totalorder %s86, %s87
      %p99 = scmp.eq.s32.totalorder %s21, 1
      %p100 = por %p98, %p99
      %p102 = scmp.ne.s32.totalorder %s87, %s101
      %p103 = scmp.eq.s32.totalorder %s21, 0
      %p104 = por %p102, %p103
      %s105 = ssub.s32 %s22, %s34
      %s106 = ssub.s32 %s23, %s30
      %s107 = sor.u32 %s105, %s106
      %p108 = scmp.eq.s32.totalorder %s107, 0
      %s110 = sadd.s32 %s109, 1
      %s111 = scalar_select %p108, %s109, %s110
      %p114 = pneg %p108
      %p115 = scmp.eq.s32.totalorder %s15, 1
      %p116 = por %p114, %p115
      %p117 = scmp.ne.s32.totalorder %s109, %s112
      %p118 = scmp.eq.s32.totalorder %s15, 0
      %p119 = por %p117, %p118
      %p120 = scmp.ne.s32.totalorder %s109, %s112
      %p121 = scmp.eq.s32.totalorder %s20, 1
      %p122 = por %p120, %p121
      %p123 = scmp.ne.s32.totalorder %s112, %s113
      %p124 = scmp.eq.s32.totalorder %s20, 0
      %p125 = por %p123, %p124
      %p126 = scmp.ne.s32.totalorder %s112, %s113
      %p127 = scmp.eq.s32.totalorder %s21, 1
      %p128 = por %p126, %p127
      %p130 = scmp.ne.s32.totalorder %s113, %s129
      %p131 = scmp.eq.s32.totalorder %s21, 0
      %p132 = por %p130, %p131
      %p133 = scmp.le.s32.totalorder 1, %s15
      %p134 = scmp.lt.s32.totalorder %s15, 3
      %p135 = pnand %p133, %p134
      %p136 = pneg %p135
      // Predicated region
      $region9: #{tpu_custom_call.1} parent=5 // pred_check
        _
      $region10: #{tpu_custom_call.1} parent=5 // pred_check_branch
        %138 = sbr.rel (%p135) target = $region12
      $region11: #{tpu_custom_call.1} parent=5 // pred_region
        %s139 = ssub.s32 %s15, 1
        // Predicated region
        $region13: #{tpu_custom_call.1} parent=11 // pred_check
          %p140 = pneg %p76
        $region14: #{tpu_custom_call.1} parent=11 // pred_check_branch
          %142 = sbr.rel (%p140) target = $region16
        $region15: #{tpu_custom_call.1} parent=11 // pred_region
          _
        $region16: #{tpu_custom_call.1} parent=11 // pred_fallthru
          _
        // Predicated region
        $region17: #{tpu_custom_call.1} parent=11 // pred_check
          %p143 = pneg %p97
        $region18: #{tpu_custom_call.1} parent=11 // pred_check_branch
          %145 = sbr.rel (%p143) target = $region20
        $region19: #{tpu_custom_call.1} parent=11 // pred_region
          _
        $region20: #{tpu_custom_call.1} parent=11 // pred_fallthru
          _
      $region12: #{tpu_custom_call.1} parent=5 // pred_fallthru
        _
      %p146 = scmp.lt.s32.totalorder %s15, 2
      // Predicated region
      $region21: #{tpu_custom_call.1} parent=5 // pred_check
        %p147 = pneg %p146
      $region22: #{tpu_custom_call.1} parent=5 // pred_check_branch
        %149 = sbr.rel (%p147) target = $region24
      $region23: #{tpu_custom_call.1} parent=5 // pred_region
        // Predicated region
        $region25: #{tpu_custom_call.1} parent=23 // pred_check
          %p150 = pneg %p49
        $region26: #{tpu_custom_call.1} parent=23 // pred_check_branch
          %152 = sbr.rel (%p150) target = $region28
        $region27: #{tpu_custom_call.1} parent=23 // pred_region
          %s153 = sand.u32 %s39, 1
          %s154 = scalar_lea.sflag [#allocation3], %s153
          %s155 = sand.u32 %s39, 1
          %s156 = smul.addr %s155, 16
          %s157 = scalar_lea.vmem [#allocation2], %s156
          %s159 = ssub.s32 256, 256
          %160 = vsyncadd %s154, %s159
          %s161 = smul.addr %s22, 2
          %s162 = sadd.s32 %s23, %s161
          %s163 = smul.addr %s162, 128
          %s164 = scalar_lea.hbm %s0, %s163
          %s165 = sshll.u32 %s157, 4
          %s166 = int_to_ptr.vmem [resolvable:$true] %s165
          %171 = dma.hbm_to_vmem [thread:$0]  %s164, 256, %s166, %s154, 128, 128, 8
        $region28: #{tpu_custom_call.1} parent=23 // pred_fallthru
          _
      $region24: #{tpu_custom_call.1} parent=5 // pred_fallthru
        _
      %p172 = scmp.le.s32.totalorder 1, %s15
      %p173 = scmp.lt.s32.totalorder %s15, 3
      %p174 = pnand %p172, %p173
      %p175 = pneg %p174
      // Predicated region
      $region29: #{tpu_custom_call.1} parent=5 // pred_check
        _
      $region30: #{tpu_custom_call.1} parent=5 // pred_check_branch
        %177 = sbr.rel (%p174) target = $region32
      $region31: #{tpu_custom_call.1} parent=5 // pred_region
        %s178 = ssub.s32 %s15, 1
        %s179 = sand.u32 %s42, 1
        %s180 = scalar_lea.sflag [#allocation3], %s179
        %s181 = sand.u32 %s42, 1
        %s182 = smul.addr %s181, 16
        %s183 = scalar_lea.vmem [#allocation2], %s182
        // Predicated region
        $region33: #{tpu_custom_call.1} parent=31 // pred_check
          %p184 = pneg %p55
        $region34: #{tpu_custom_call.1} parent=31 // pred_check_branch
          %186 = sbr.rel (%p184) target = $region36
        $region35: #{tpu_custom_call.1} parent=31 // pred_region
          %187 = dma.done %s180, 256
        $region36: #{tpu_custom_call.1} parent=31 // pred_fallthru
          _
        %s188 = sand.u32 %s42, 1
        %s189 = scalar_lea.sflag [#allocation3], %s188
        %s190 = sand.u32 %s42, 1
        %s191 = smul.addr %s190, 16
        %s192 = scalar_lea.vmem [#allocation2], %s191
        %p193 = pneg %p55
        %p194 = pneg %p52
        %p195 = pneg %p76
        %p196 = pneg %p73
        %p197 = pneg %p97
        %p198 = pneg %p94
        %p199 = pneg %p125
        %p200 = pneg %p122
        %s201 = sand.u32 %s112, 1
        %s202 = scalar_lea.sflag [#allocation4], %s201
        %s203 = sand.u32 %s112, 1
        %s204 = smul.addr %s203, 8
        %s205 = scalar_lea.vmem [#allocation5], %s204
        %v206 = vld [vmem:[%s1] sm:$0xff]
        %v207 = vld [vmem:[%s183] sm:$0xff]
        %v208 = vld [vmem:[%s183 + $0x8] sm:$0xff]
        %v209 = vld [vmem:[%s2] sm:$0xff]
        %211 = vset.pattern.permute.xlu0 0
        %212 = vperm.xlu0 %211, %v209
        %v213 = vpop.permute.xlu0 %212
        %vm215 = vcmask 130048
        %v217 = vsel %vm215, %v206, 0
        %219 = vmatprep.subr.mxu0 0.0
        %220 = vmatpush1.msra.mxu0 %v207
        %221 = vmatprep.subr.mxu0 0.0
        %222 = vmatpush1.msra.mxu0 %v208
        %223 = vmatprep.subr.mxu0 0.0
        %224 = vmatpush1.msra.mxu0 0.0
        %225 = vmatprep.subr.mxu0 0.0
        %226 = vmatpush1.msra.mxu0 0.0
        %227 = vmatprep.subr.mxu0 0.0
        %228 = vmatpush1.msra.mxu0 0.0
        %229 = vmatprep.subr.mxu0 0.0
        %230 = vmatpush1.msra.mxu0 0.0
        %231 = vmatprep.subr.mxu0 0.0
        %232 = vmatpush1.msra.mxu0 0.0
        %233 = vmatprep.subr.mxu0 0.0
        %234 = vmatpush1.msra.mxu0 0.0
        %235 = vmatprep.subr.mxu0 0.0
        %236 = vmatpush1.msra.mxu0 0.0
        %237 = vmatprep.subr.mxu0 0.0
        %238 = vmatpush1.msra.mxu0 0.0
        %239 = vmatprep.subr.mxu0 0.0
        %240 = vmatpush1.msra.mxu0 0.0
        %241 = vmatprep.subr.mxu0 0.0
        %242 = vmatpush1.msra.mxu0 0.0
        %243 = vmatprep.subr.mxu0 0.0
        %244 = vmatpush1.msra.mxu0 0.0
        %245 = vmatprep.subr.mxu0 0.0
        %246 = vmatpush1.msra.mxu0 0.0
        %247 = vmatprep.subr.mxu0 0.0
        %248 = vmatpush1.msra.mxu0 0.0
        %249 = vmatprep.subr.mxu0 0.0
        %250 = vmatpush1.msra.mxu0 0.0
        %251 = vmatprep.subr.mxu0 0.0
        %252 = vmatpush1.msra.mxu0 0.0
        %253 = vmatprep.subr.mxu0 0.0
        %254 = vmatpush1.msra.mxu0 0.0
        %255 = vmatprep.subr.mxu0 0.0
        %256 = vmatpush1.msra.mxu0 0.0
        %257 = vmatprep.subr.mxu0 0.0
        %258 = vmatpush1.msra.mxu0 0.0
        %259 = vmatprep.subr.mxu0 0.0
        %260 = vmatpush1.msra.mxu0 0.0
        %261 = vmatprep.subr.mxu0 0.0
        %262 = vmatpush1.msra.mxu0 0.0
        %263 = vmatprep.subr.mxu0 0.0
        %264 = vmatpush1.msra.mxu0 0.0
        %265 = vmatprep.subr.mxu0 0.0
        %266 = vmatpush1.msra.mxu0 0.0
        %267 = vmatprep.subr.mxu0 0.0
        %268 = vmatpush1.msra.mxu0 0.0
        %269 = vmatprep.subr.mxu0 0.0
        %270 = vmatpush1.msra.mxu0 0.0
        %271 = vmatprep.subr.mxu0 0.0
        %272 = vmatpush1.msra.mxu0 0.0
        %273 = vmatprep.subr.mxu0 0.0
        %274 = vmatpush1.msra.mxu0 0.0
        %275 = vmatprep.subr.mxu0 0.0
        %276 = vmatpush1.msra.mxu0 0.0
        %277 = vmatprep.subr.mxu0 0.0
        %278 = vmatpush1.msra.mxu0 0.0
        %279 = vmatprep.subr.mxu0 0.0
        %280 = vmatpush1.msra.mxu0 0.0
        %281 = vmatprep.subr.mxu0 0.0
        %282 = vmatpush1.msra.mxu0 0.0
        %283 = vmatprep.mubr.f32.mxu0 0.0
        %284 = vmatmul.mubr.f32.gmra.mrb[0].mxu0 %v217
        %v285 = vpop.f32.mrb[0].mxu0
        %v286 = vadd.f32 %v213, %v285
        %v287 = vpop.f32.mrb[0].mxu0
        %288 = vdwg.mxu0
        %v289 = vmul.f32 %v286, 0.5
        %v290 = vtanh.pop %v289
        %v291 = vadd.f32 %v290, 1.0
        %v292 = vmul.f32 %v289, %v291
        %vm293 = vcmask 523264
        %294 = vst.msk [vmem:[%s205] sm:$0xff] %vm293, %v292
        %s295 = sand.u32 %s112, 1
        %s296 = scalar_lea.sflag [#allocation4], %s295
        %s297 = sand.u32 %s112, 1
        %s298 = smul.addr %s297, 8
        %s299 = scalar_lea.vmem [#allocation5], %s298
        // Predicated region
        $region37: #{tpu_custom_call.1} parent=31 // pred_check
          %p300 = pneg %p122
        $region38: #{tpu_custom_call.1} parent=31 // pred_check_branch
          %302 = sbr.rel (%p300) target = $region40
        $region39: #{tpu_custom_call.1} parent=31 // pred_region
          %s304 = ssub.s32 128, 128
          %305 = vsyncadd %s296, %s304
          %s306 = sadd.s32 %s25, %s24
          %s307 = smul.addr %s306, 128
          %s308 = scalar_lea.hbm %s3, %s307
          %s310 = sshll.u32 %s299, 4
          %s311 = int_to_ptr.vmem [resolvable:$true] %s310
          %313 = dma.vmem_to_hbm [thread:$0]  %s311, 128, %s308, %s296
        $region40: #{tpu_custom_call.1} parent=31 // pred_fallthru
          _
      $region32: #{tpu_custom_call.1} parent=5 // pred_fallthru
        _
      %p314 = scmp.le.s32.totalorder 2, %s15
      // Predicated region
      $region41: #{tpu_custom_call.1} parent=5 // pred_check
        %p315 = pneg %p314
      $region42: #{tpu_custom_call.1} parent=5 // pred_check_branch
        %317 = sbr.rel (%p315) target = $region44
      $region43: #{tpu_custom_call.1} parent=5 // pred_region
        %s318 = ssub.s32 %s15, 2
        // Predicated region
        $region45: #{tpu_custom_call.1} parent=43 // pred_check
          %p319 = pneg %p128
        $region46: #{tpu_custom_call.1} parent=43 // pred_check_branch
          %321 = sbr.rel (%p319) target = $region48
        $region47: #{tpu_custom_call.1} parent=43 // pred_region
          %s322 = sand.u32 %s113, 1
          %s323 = scalar_lea.sflag [#allocation4], %s322
          %s324 = sand.u32 %s113, 1
          %s325 = smul.addr %s324, 8
          %s326 = scalar_lea.vmem [#allocation5], %s325
          %327 = dma.done %s323, 128
        $region48: #{tpu_custom_call.1} parent=43 // pred_fallthru
          _
      $region44: #{tpu_custom_call.1} parent=5 // pred_fallthru
        _
    $region6: #{tpu_custom_call.1} parent=1 // loop_footer
      %s19 = sadd.s32 1, %s15
    $region7: #{tpu_custom_call.1} parent=1 // loop_footer_branch
      %14 = sbr.rel target = $region3
    $region8: #{tpu_custom_call.1} parent=1 // loop_exit
      _
    %328 = vsyncpa [#allocation3], 1
    %s329 = scalar_lea.sflag [#allocation3], 1
    %330 = vsyncpa %s329, 1
    %331 = vsyncpa [#allocation4], 1
    %s332 = scalar_lea.sflag [#allocation4], 1
    %333 = vsyncpa %s332, 1

</llo_original>
